<compile_context>
chip_gen: v5e
topology: v5e:2x2
jax: 0.10.0
libtpu: 0.0.40
codegen_flags: <defaults>
</compile_context>

<pallas_src>
import jax
import jax.numpy as jnp
from jax.experimental import pallas as pl
from jax.experimental.pallas import tpu as pltpu

FEAT_PAD = 128             # padded backbone feature width (lane-dense MXU rows)
K_ALIGN = 32               # im2col contraction dim padded 27 -> 32
TILE_CAP = 32768           # max spatial columns per grid step
TILE_BYTE_BUDGET = 12 << 20  # double-buffered streamed bytes per step


# ----------------------------------------------------------------------------
# Pallas kernel: one (p_split, batch, spatial-tile) grid step.
# ----------------------------------------------------------------------------
def sixdof_kernel(patches_ref, w1t_ref, b1_ref, whs_ref, bhs_ref,
                  maps_ref, psum_ref):
    j = pl.program_id(2)

    # Backbone 3x3 conv as matmul (bf16 MXU, f32 acc) + bias + ReLU.
    # (FEAT_PAD, K) @ (K, TILE) -> (FEAT_PAD, TILE), fully lane-dense.
    feat = jnp.dot(w1t_ref[...], patches_ref[...],
                   preferred_element_type=jnp.float32)
    feat = jnp.maximum(feat + b1_ref[...], 0.0)     # f32 elementwise (v5e-safe)

    # Fused heatmap + segmap 1x1 heads: (2, FEAT_PAD) @ (FEAT_PAD, TILE).
    scores = jnp.dot(whs_ref[...], feat, preferred_element_type=jnp.float32)
    # Sigmoid in f32 (EUP), cast to bf16 only at the store (halves writeback).
    maps_ref[...] = jax.nn.sigmoid(scores + bhs_ref[...]).astype(maps_ref.dtype)

    # Classifier GAP: accumulate partial feature sums in the resident output
    # block.  Megacore-safe: each (p, b) owns its block; j is the innermost
    # "arbitrary" (sequential) grid axis.
    @pl.when(j == 0)
    def _init():
        psum_ref[...] = jnp.zeros_like(psum_ref)

    psum_ref[...] += jnp.sum(feat, axis=1, keepdims=True)[None, None]


# ----------------------------------------------------------------------------
# Helpers
# ----------------------------------------------------------------------------
def _round_up(x, m):
    return (x + m - 1) // m * m


def _pick_tile(hw):
    """Largest multiple of 128 dividing H*W, capped by a VMEM byte budget."""
    bytes_per_col = 2 * (K_ALIGN * 2 + 2 * 2)   # 2x-buffered bf16 in + bf16 out
    cap = min(hw, TILE_CAP, (TILE_BYTE_BUDGET // bytes_per_col) // 128 * 128)
    tile = 0
    t = 128
    while t <= cap:
        if hw % t == 0:
            tile = t
        t += 128
    if tile == 0:
        raise ValueError(f"H*W={hw} must be a multiple of 128")
    # vmem limit from real buffer arithmetic (streamed tiles) + headroom for
    # the tiny resident weights and compiler scratch.
    streamed = 2 * tile * (K_ALIGN * 2 + 2 * 2)
    vmem_limit = int(streamed + (8 << 20))
    return tile, vmem_limit


def _patches_T(x_nchw, k_pad):
    """3x3 same-padding patches, TRANSPOSED: (B,C,H,W) -> (k_pad, B*H*W) bf16."""
    b, c, h, w = x_nchw.shape
    xp = jnp.pad(x_nchw, ((0, 0), (0, 0), (1, 1), (1, 1)))
    taps = [xp[:, :, dy:dy + h, dx:dx + w] for dy in range(3) for dx in range(3)]
    pt = jnp.stack(taps, axis=0).transpose(0, 2, 1, 3, 4)   # (9, C, B, H, W)
    pt = pt.reshape(9 * c, b * h * w)                       # k = tap*C + ch
    pt = jnp.pad(pt, ((0, k_pad - 9 * c), (0, 0)))
    return pt.astype(jnp.bfloat16)


def init_params(key, in_ch=3, feat_ch=8, num_classes=1):
    k1, k2, k3, k4 = jax.random.split(key, 4)
    scale = 0.1
    return {
        "w1": scale * jax.random.normal(k1, (9 * in_ch, feat_ch), jnp.float32),
        "b1": jnp.zeros((1, feat_ch), jnp.float32),
        "w_heat": scale * jax.random.normal(k2, (feat_ch, 1), jnp.float32),
        "b_heat": jnp.zeros((1, 1), jnp.float32),
        "w_seg": scale * jax.random.normal(k3, (feat_ch, 1), jnp.float32),
        "b_seg": jnp.zeros((1, 1), jnp.float32),
        "w_cls": scale * jax.random.normal(k4, (feat_ch, num_classes),
                                           jnp.float32),
        "b_cls": jnp.zeros((1, num_classes), jnp.float32),
    }


# ----------------------------------------------------------------------------
# JAX wrapper
# ----------------------------------------------------------------------------
@jax.jit
def sixdofnet_forward(x_nchw, params):
    """x_nchw: (B, C, H, W) float32 — same layout as the PyTorch module."""
    b, c, h, w = x_nchw.shape
    hw = h * w
    m = b * hw
    feat_ch = params["w1"].shape[1]
    k = params["w1"].shape[0]
    k_pad = _round_up(k, K_ALIGN)

    tile, vmem_limit = _pick_tile(hw)
    num_j = hw // tile
    # Extra "parallel" split of the spatial axis so both v7x TensorCores are
    # used even when B == 1 (harmless extra grid axis on 1-TC v5e/v6e).
    p_split = 2 if num_j % 2 == 0 else 1
    j_per = num_j // p_split

    # One fused bf16 materialization of the transposed patch matrix.
    patches = _patches_T(x_nchw, k_pad)                       # (k_pad, M) bf16

    # Lane-dense, zero-padded resident weights.
    w1t = jnp.zeros((FEAT_PAD, k_pad), jnp.float32)
    w1t = w1t.at[:feat_ch, :k].set(params["w1"].T).astype(jnp.bfloat16)
    b1p = jnp.zeros((FEAT_PAD, 1), jnp.float32)
    b1p = b1p.at[:feat_ch, 0].set(params["b1"][0])
    whs = jnp.zeros((2, FEAT_PAD), jnp.float32)
    whs = whs.at[0, :feat_ch].set(params["w_heat"][:, 0])
    whs = whs.at[1, :feat_ch].set(params["w_seg"][:, 0])
    bhs = jnp.concatenate([params["b_heat"], params["b_seg"]], axis=0)  # (2,1)

    def const(shape):   # tiny resident weights: constant block index
        return pl.BlockSpec(shape, lambda p, bi, ji: (0,) * len(shape))

    def col_index(p, bi, ji):
        return (0, bi * num_j + p * j_per + ji)

    maps, psum = pl.pallas_call(
        sixdof_kernel,
        out_shape=(
            jax.ShapeDtypeStruct((2, m), jnp.bfloat16),        # rows: heat, seg
            jax.ShapeDtypeStruct((p_split, b, FEAT_PAD, 1), jnp.float32),
        ),
        grid_spec=pltpu.PrefetchScalarGridSpec(
            num_scalar_prefetch=0,
            grid=(p_split, b, j_per),
            in_specs=[
                # Streamed, lane-dense transposed patch tile.  If xprof shows
                # exposed DMA, add pipeline_mode=pl.Buffered(3) here.
                pl.BlockSpec((k_pad, tile), col_index),
                const((FEAT_PAD, k_pad)),    # w1^T
                const((FEAT_PAD, 1)),        # b1
                const((2, FEAT_PAD)),        # fused heat/seg weight
                const((2, 1)),               # fused heat/seg bias
            ],
            out_specs=(
                pl.BlockSpec((2, tile), col_index),
                pl.BlockSpec((1, 1, FEAT_PAD, 1),
                             lambda p, bi, ji: (p, bi, 0, 0)),
            ),
        ),
        compiler_params=pltpu.CompilerParams(
            dimension_semantics=("parallel", "parallel", "arbitrary"),
            vmem_limit_bytes=vmem_limit,
        ),
    )(patches, w1t, b1p, whs, bhs)

    maps_f32 = maps.astype(jnp.float32)
    heatmaps = maps_f32[0].reshape(b, h, w)[:, None, :, :]
    segmaps = maps_f32[1].reshape(b, h, w)[:, None, :, :]

    # Global-average-pool classifier: reduce the per-core partial sums and run
    # the tiny (B, F) @ (F, num_classes) matmul in the wrapper.
    pooled = psum.sum(axis=0)[:, :feat_ch, 0] * (1.0 / hw)     # (B, feat_ch)
    cls = pooled @ params["w_cls"] + params["b_cls"]
    return heatmaps, segmaps, cls


# ----------------------------------------------------------------------------
# Pure-JAX f32 reference of the same synthetic SixDOFNet forward.
# ----------------------------------------------------------------------------
def _im2col_3x3(x_nhwc):
    b, h, w, c = x_nhwc.shape
    xp = jnp.pad(x_nhwc, ((0, 0), (1, 1), (1, 1), (0, 0)))
    cols = [xp[:, dy:dy + h, dx:dx + w, :]
            for dy in range(3) for dx in range(3)]
    return jnp.concatenate(cols, axis=-1).reshape(b * h * w, 9 * c)


def reference_forward(x_nchw, params):
    b, c, h, w = x_nchw.shape
    x_nhwc = jnp.transpose(x_nchw, (0, 2, 3, 1))
    patches = _im2col_3x3(x_nhwc)
    feat = jnp.maximum(patches @ params["w1"] + params["b1"], 0.0)
    heat = jax.nn.sigmoid(feat @ params["w_heat"] + params["b_heat"])
    seg = jax.nn.sigmoid(feat @ params["w_seg"] + params["b_seg"])
    pooled = feat.reshape(b, h * w, -1).mean(axis=1)
    cls = pooled @ params["w_cls"] + params["b_cls"]
    heat = heat.reshape(b, h, w, 1).transpose(0, 3, 1, 2)
    seg = seg.reshape(b, h, w, 1).transpose(0, 3, 1, 2)
    return heat, seg, cls


if __name__ == "__main__":
    key = jax.random.PRNGKey(0)
    k_x, k_p = jax.random.split(key)

    B, C, H, W = 2, 3, 16, 16
    x = jax.random.normal(k_x, (B, C, H, W), jnp.float32)
    params = init_params(k_p, in_ch=C, feat_ch=8, num_classes=1)

    heatmaps, segmaps, cls = sixdofnet_forward(x, params)
    jax.block_until_ready((heatmaps, segmaps, cls))

    assert heatmaps.shape == (B, 1, H, W)
    assert segmaps.shape == (B, 1, H, W)
    assert cls.shape == (B, 1)
    assert bool(jnp.all((heatmaps >= 0) & (heatmaps <= 1)))
    assert bool(jnp.all((segmaps >= 0) & (segmaps <= 1)))

    # Numerical check against the pure-JAX f32 reference (bf16 tolerance).
    ref_h, ref_s, ref_c = reference_forward(x, params)
    assert bool(jnp.allclose(heatmaps, ref_h, atol=1e-2, rtol=1e-2))
    assert bool(jnp.allclose(segmaps, ref_s, atol=1e-2, rtol=1e-2))
    assert bool(jnp.allclose(cls, ref_c, atol=1e-2, rtol=1e-2))

    print("KERNEL_OK")
</pallas_src>

<mosaic_0001>
module attributes {stable_mosaic.version = 11 : i64} {
  func.func @sixdof_kernel(%arg0: i32, %arg1: i32, %arg2: i32, %arg3: memref<32x256xbf16, #tpu.memory_space<vmem>>, %arg4: memref<128x32xbf16, #tpu.memory_space<vmem>>, %arg5: memref<128x1xf32, #tpu.memory_space<vmem>>, %arg6: memref<2x128xf32, #tpu.memory_space<vmem>>, %arg7: memref<2x1xf32, #tpu.memory_space<vmem>>, %arg8: memref<2x256xbf16, #tpu.memory_space<vmem>>, %arg9: memref<1x1x128x1xf32, #tpu.memory_space<vmem>>) attributes {dimension_semantics = [#tpu.dimension_semantics<parallel>, #tpu.dimension_semantics<parallel>, #tpu.dimension_semantics<arbitrary>], iteration_bounds = array<i64: 1, 2, 1>, scalar_prefetch = 0 : i64, scratch_operands = 0 : i64, tpu.core_type = #tpu.core_type<tc>, window_params = [{transform_indices = @transform_0, window_bounds = array<i64: 32, 256>}, {pipeline_mode = #tpu.pipeline_mode<synchronous>, transform_indices = @transform_1, window_bounds = array<i64: 128, 32>}, {pipeline_mode = #tpu.pipeline_mode<synchronous>, transform_indices = @transform_2, window_bounds = array<i64: 128, 1>}, {pipeline_mode = #tpu.pipeline_mode<synchronous>, transform_indices = @transform_3, window_bounds = array<i64: 2, 128>}, {pipeline_mode = #tpu.pipeline_mode<synchronous>, transform_indices = @transform_4, window_bounds = array<i64: 2, 1>}, {transform_indices = @transform_5, window_bounds = array<i64: 2, 256>}, {transform_indices = @transform_6, window_bounds = array<i64: 1, 1, 128, 1>}]} {
    %c0 = arith.constant 0 : index
    %c0_0 = arith.constant 0 : index
    %0 = vector.load %arg4[%c0, %c0_0] : memref<128x32xbf16, #tpu.memory_space<vmem>>, vector<128x32xbf16>
    %c0_1 = arith.constant 0 : index
    %c0_2 = arith.constant 0 : index
    %1 = vector.load %arg3[%c0_1, %c0_2] : memref<32x256xbf16, #tpu.memory_space<vmem>>, vector<32x256xbf16>
    %cst = arith.constant dense<0.000000e+00> : vector<128x256xf32>
    %2 = tpu.matmul %0, %1, %cst {dimension_numbers = #tpu.dot_dimension_numbers<[1], [0], [0], [1], [0, 0, 1, 1], [], []>} : vector<128x32xbf16>, vector<32x256xbf16>, vector<128x256xf32> -> vector<128x256xf32>
    %c0_3 = arith.constant 0 : index
    %c0_4 = arith.constant 0 : index
    %3 = vector.load %arg5[%c0_3, %c0_4] : memref<128x1xf32, #tpu.memory_space<vmem>>, vector<128x1xf32>
    %4 = vector.broadcast %3 : vector<128x1xf32> to vector<128x256xf32>
    %5 = arith.addf %2, %4 : vector<128x256xf32>
    %cst_5 = arith.constant 0.000000e+00 : f32
    %6 = vector.broadcast %cst_5 : f32 to vector<128x256xf32>
    %7 = arith.maximumf %5, %6 : vector<128x256xf32>
    %c0_6 = arith.constant 0 : index
    %c0_7 = arith.constant 0 : index
    %8 = vector.load %arg6[%c0_6, %c0_7] : memref<2x128xf32, #tpu.memory_space<vmem>>, vector<2x128xf32>
    %cst_8 = arith.constant dense<0.000000e+00> : vector<2x256xf32>
    %9 = tpu.matmul %8, %7, %cst_8 {dimension_numbers = #tpu.dot_dimension_numbers<[1], [0], [0], [1], [0, 0, 1, 1], [], []>} : vector<2x128xf32>, vector<128x256xf32>, vector<2x256xf32> -> vector<2x256xf32>
    %c0_9 = arith.constant 0 : index
    %c0_10 = arith.constant 0 : index
    %10 = vector.load %arg7[%c0_9, %c0_10] : memref<2x1xf32, #tpu.memory_space<vmem>>, vector<2x1xf32>
    %11 = vector.broadcast %10 : vector<2x1xf32> to vector<2x256xf32>
    %12 = arith.addf %9, %11 : vector<2x256xf32>
    %13 = arith.negf %12 : vector<2x256xf32>
    %14 = math.exp %13 : vector<2x256xf32>
    %cst_11 = arith.constant 1.000000e+00 : f32
    %15 = vector.broadcast %cst_11 : f32 to vector<2x256xf32>
    %16 = arith.addf %15, %14 : vector<2x256xf32>
    %17 = arith.divf %15, %16 : vector<2x256xf32>
    %18 = arith.truncf %17 : vector<2x256xf32> to vector<2x256xbf16>
    %c0_12 = arith.constant 0 : index
    %c0_13 = arith.constant 0 : index
    %19 = vector.load %arg8[%c0_12, %c0_13] : memref<2x256xbf16, #tpu.memory_space<vmem>>, vector<2x256xbf16>
    tpu.vector_store %arg8[%c0_12, %c0_13], %18 {strides = array<i32>} : memref<2x256xbf16, #tpu.memory_space<vmem>>, vector<2x256xbf16>,
    %c0_i32 = arith.constant 0 : i32
    %20 = arith.cmpi eq, %arg2, %c0_i32 : i32
    %21 = arith.extui %20 : i1 to i32
    %c0_i32_14 = arith.constant 0 : i32
    %22 = arith.cmpi ne, %21, %c0_i32_14 : i32
    scf.if %22 {
      %cst_24 = arith.constant 0.000000e+00 : f32
      %29 = vector.broadcast %cst_24 : f32 to vector<1x1x128x1xf32>
      %c0_25 = arith.constant 0 : index
      %c0_26 = arith.constant 0 : index
      %c0_27 = arith.constant 0 : index
      %c0_28 = arith.constant 0 : index
      %30 = vector.load %arg9[%c0_25, %c0_26, %c0_27, %c0_28] : memref<1x1x128x1xf32, #tpu.memory_space<vmem>>, vector<1x1x128x1xf32>
      tpu.vector_store %arg9[%c0_25, %c0_26, %c0_27, %c0_28], %29 {strides = array<i32>} : memref<1x1x128x1xf32, #tpu.memory_space<vmem>>, vector<1x1x128x1xf32>,
    } else {
    }
    %c0_15 = arith.constant 0 : index
    %c0_16 = arith.constant 0 : index
    %c0_17 = arith.constant 0 : index
    %c0_18 = arith.constant 0 : index
    %23 = vector.load %arg9[%c0_15, %c0_16, %c0_17, %c0_18] : memref<1x1x128x1xf32, #tpu.memory_space<vmem>>, vector<1x1x128x1xf32>
    %cst_19 = arith.constant dense<0.000000e+00> : vector<128xf32>
    %24 = vector.multi_reduction <add>, %7, %cst_19 [1] : vector<128x256xf32> to vector<128xf32>
    %25 = vector.shape_cast %24 : vector<128xf32> to vector<128x1xf32>
    %26 = vector.shape_cast %25 : vector<128x1xf32> to vector<1x1x128x1xf32>
    %27 = arith.addf %23, %26 : vector<1x1x128x1xf32>
    %c0_20 = arith.constant 0 : index
    %c0_21 = arith.constant 0 : index
    %c0_22 = arith.constant 0 : index
    %c0_23 = arith.constant 0 : index
    %28 = vector.load %arg9[%c0_20, %c0_21, %c0_22, %c0_23] : memref<1x1x128x1xf32, #tpu.memory_space<vmem>>, vector<1x1x128x1xf32>
    tpu.vector_store %arg9[%c0_20, %c0_21, %c0_22, %c0_23], %27 {strides = array<i32>} : memref<1x1x128x1xf32, #tpu.memory_space<vmem>>, vector<1x1x128x1xf32>,
    return
  }
  func.func @transform_0(%arg0: i32, %arg1: i32, %arg2: i32) -> (i32, i32) {
    %c1_i32 = arith.constant 1 : i32
    %0 = arith.muli %arg1, %c1_i32 : i32
    %c1_i32_0 = arith.constant 1 : i32
    %1 = arith.muli %arg0, %c1_i32_0 : i32
    %2 = arith.addi %0, %1 : i32
    %3 = arith.addi %2, %arg2 : i32
    %c0_i32 = arith.constant 0 : i32
    %c0_i32_1 = arith.constant 0 : i32
    return %c0_i32, %3 : i32, i32
  }
  func.func @transform_1(%arg0: i32, %arg1: i32, %arg2: i32) -> (i32, i32) {
    %c0_i32 = arith.constant 0 : i32
    %c0_i32_0 = arith.constant 0 : i32
    %c0_i32_1 = arith.constant 0 : i32
    return %c0_i32, %c0_i32_0 : i32, i32
  }
  func.func @transform_2(%arg0: i32, %arg1: i32, %arg2: i32) -> (i32, i32) {
    %c0_i32 = arith.constant 0 : i32
    %c0_i32_0 = arith.constant 0 : i32
    %c0_i32_1 = arith.constant 0 : i32
    return %c0_i32, %c0_i32_0 : i32, i32
  }
  func.func @transform_3(%arg0: i32, %arg1: i32, %arg2: i32) -> (i32, i32) {
    %c0_i32 = arith.constant 0 : i32
    %c0_i32_0 = arith.constant 0 : i32
    %c0_i32_1 = arith.constant 0 : i32
    return %c0_i32, %c0_i32_0 : i32, i32
  }
  func.func @transform_4(%arg0: i32, %arg1: i32, %arg2: i32) -> (i32, i32) {
    %c0_i32 = arith.constant 0 : i32
    %c0_i32_0 = arith.constant 0 : i32
    %c0_i32_1 = arith.constant 0 : i32
    return %c0_i32, %c0_i32_0 : i32, i32
  }
  func.func @transform_5(%arg0: i32, %arg1: i32, %arg2: i32) -> (i32, i32) {
    %c1_i32 = arith.constant 1 : i32
    %0 = arith.muli %arg1, %c1_i32 : i32
    %c1_i32_0 = arith.constant 1 : i32
    %1 = arith.muli %arg0, %c1_i32_0 : i32
    %2 = arith.addi %0, %1 : i32
    %3 = arith.addi %2, %arg2 : i32
    %c0_i32 = arith.constant 0 : i32
    %c0_i32_1 = arith.constant 0 : i32
    return %c0_i32, %3 : i32, i32
  }
  func.func @transform_6(%arg0: i32, %arg1: i32, %arg2: i32) -> (i32, i32, i32, i32) {
    %c0_i32 = arith.constant 0 : i32
    %c0_i32_0 = arith.constant 0 : i32
    %c0_i32_1 = arith.constant 0 : i32
    return %arg0, %arg1, %c0_i32, %c0_i32_0 : i32, i32, i32, i32
  }
}

</mosaic_0001>

<llo_original>
// kernel: squeeze.9
$region0: #{squeeze.9}
  %s0 = inlined_call_operand.vmem [shape: f32[512], index: 0, kind: input, shape index: {}]
  %s1 = inlined_call_operand.hbm [shape: f32[2,1,16,16], index: 1, kind: output, shape index: {}]
  $region1: #{squeeze.9} parent=0
    #allocation0 [shape = 'u8[16384]{0}', space=vmem, size = 0x4000, scoped, tag = 'operand span for operand 1']
    #allocation1 [shape = 's32[1]{0}', space=sflag, size = 0x4, scoped, tag = 'scoped memory for squeeze.9']
    #allocation2 [shape = 'u8[4096]{0}', space=vmem, size = 0x1000, scoped, tag = 'scoped mem for input reshape']
    %2 = vsyncpa [#allocation1], 0
    %s4 = ssub.s32 16, 1
    %v5 = vld [vmem:[%s0] sm:%s4]
    %6 = vst [vmem:[#allocation2] sm:%s4] %v5
    %v7 = vld [vmem:[#allocation2] sm:$0xf]
    %vm8 = vcmask 130048
    %9 = vst.msk [vmem:[#allocation0] ss:$8 sm:$0xf] %vm8, %v7
    %v10 = vld [vmem:[#allocation2] sm:$0xf]
    %11 = vrot.lane.b32.xlu0 %v10, 112
    %v12 = vpop.permute.xlu0 %11
    %vm13 = vcmask 130048
    %s14 = scalar_lea.vmem [#allocation0], 1
    %15 = vst.msk [vmem:[%s14] ss:$8 sm:$0xf] %vm13, %v12
    %v16 = vld [vmem:[#allocation2] sm:$0xf]
    %17 = vrot.lane.b32.xlu0 %v16, 96
    %v18 = vpop.permute.xlu0 %17
    %vm19 = vcmask 130048
    %s20 = scalar_lea.vmem [#allocation0], 2
    %21 = vst.msk [vmem:[%s20] ss:$8 sm:$0xf] %vm19, %v18
    %v22 = vld [vmem:[#allocation2] sm:$0xf]
    %23 = vrot.lane.b32.xlu0 %v22, 80
    %v24 = vpop.permute.xlu0 %23
    %vm25 = vcmask 130048
    %s26 = scalar_lea.vmem [#allocation0], 3
    %27 = vst.msk [vmem:[%s26] ss:$8 sm:$0xf] %vm25, %v24
    %v28 = vld [vmem:[#allocation2] sm:$0xf]
    %29 = vrot.lane.b32.xlu0 %v28, 64
    %v30 = vpop.permute.xlu0 %29
    %vm31 = vcmask 130048
    %s32 = scalar_lea.vmem [#allocation0], 4
    %33 = vst.msk [vmem:[%s32] ss:$8 sm:$0xf] %vm31, %v30
    %v34 = vld [vmem:[#allocation2] sm:$0xf]
    %35 = vrot.lane.b32.xlu0 %v34, 48
    %v36 = vpop.permute.xlu0 %35
    %vm37 = vcmask 130048
    %s38 = scalar_lea.vmem [#allocation0], 5
    %39 = vst.msk [vmem:[%s38] ss:$8 sm:$0xf] %vm37, %v36
    %v40 = vld [vmem:[#allocation2] sm:$0xf]
    %41 = vrot.lane.b32.xlu0 %v40, 32
    %v42 = vpop.permute.xlu0 %41
    %vm43 = vcmask 130048
    %s44 = scalar_lea.vmem [#allocation0], 6
    %45 = vst.msk [vmem:[%s44] ss:$8 sm:$0xf] %vm43, %v42
    %v46 = vld [vmem:[#allocation2] sm:$0xf]
    %47 = vrot.lane.b32.xlu0 %v46, 16
    %v48 = vpop.permute.xlu0 %47
    %vm49 = vcmask 130048
    %s50 = scalar_lea.vmem [#allocation0], 7
    %51 = vst.msk [vmem:[%s50] ss:$8 sm:$0xf] %vm49, %v48
    %53 = vsyncadd [#allocation1], 0
    %s55 = sshll.u32 [#allocation0], 4
    %s56 = int_to_ptr.vmem [resolvable:$true] %s55
    %s57 = sshll.u32 %s1, 4
    %s58 = int_to_ptr.hbm [resolvable:$true] %s57
    %60 = dma.vmem_to_hbm [thread:$0]  %s56, 512, %s58, [#allocation1]
    %62 = dma.done [#allocation1], 512
    %63 = vsyncpa [#allocation1], 1

// kernel: sixdofnet_forward.1
$region0: #{sixdofnet_forward.1}
  #allocation0 [shape = 'u32[]', space=smem, size = 0x4, offset = 0x4, fixed_abs, tag = 'smem constant byte address 0x4 - core index']
  #allocation1 [shape = 'u32[72,128]{1,0:T(1,128)}', space=vmem, size = 0x9000, scoped, tag = 'internal scratch']
  %s0 = inlined_call_operand.vmem [shape: bf16[32,512], index: 0, kind: input, shape index: {}]
  %s1 = inlined_call_operand.vmem [shape: bf16[128,32], index: 1, kind: input, shape index: {}]
  %s2 = inlined_call_operand.vmem [shape: f32[128,1], index: 2, kind: input, shape index: {}]
  %s3 = inlined_call_operand.vmem [shape: f32[2,128], index: 3, kind: input, shape index: {}]
  %s4 = inlined_call_operand.vmem [shape: f32[2,1], index: 4, kind: input, shape index: {}]
  %s5 = inlined_call_operand.vmem [shape: bf16[2,512], index: 5, kind: output, shape index: {0}]
  %s6 = inlined_call_operand.vmem [shape: f32[1,2,128,1], index: 6, kind: output, shape index: {1}]
  %7 = xla_tuple %s5, %s6
  %s8 = sld [smem:[#allocation0]]
  $region103: #{sixdofnet_forward.1} parent=0
    _
  %s10 = ssub.s32 1, %s8
  %s11 = scalar_select 0, %s10, %s8
  $region1: #{sixdofnet_forward.1} parent=0
    #allocation2 [shape = 'u8[32768]{0}', space=vmem, size = 0x8000, scoped, tag = 'input window, operand 0']
    loop: start=0, step=1, limit=4
    $region2: #{sixdofnet_forward.1} parent=1 // loop_pre_header
      _
    $region3: #{sixdofnet_forward.1} parent=1 // loop_header
      %s13 = sphi 0, %s17
      %p14 = scmp.ge.s32.totalorder %s13, 4
      %s20 = sphi 0, %s39
      %s21 = sphi 0, %s35
      %s22 = sphi 0, %s31
      %s23 = sphi 0, %s20
      %s24 = sphi 0, %s21
      %s25 = sphi 0, %s22
      %s26 = sphi 0, %s23
      %s27 = sphi 0, %s24
      %s28 = sphi 0, %s25
      %s46 = sphi 0, %s48
      %s49 = sphi 0, %s46
      %s50 = sphi 0, %s49
      %s66 = sphi 0, %s50
      %s70 = sphi 0, %s70
      %s72 = sphi 0, %s70
      %s73 = sphi 0, %s72
      %s87 = sphi 0, %s73
      %s91 = sphi 0, %s91
      %s93 = sphi 0, %s91
      %s94 = sphi 0, %s93
      %s108 = sphi 0, %s94
      %s112 = sphi 0, %s112
      %s114 = sphi 0, %s112
      %s115 = sphi 0, %s114
      %s129 = sphi 0, %s115
      %s133 = sphi 0, %s133
      %s135 = sphi 0, %s133
      %s136 = sphi 0, %s135
      %s150 = sphi 0, %s136
      %s160 = sphi 0, %s162
      %s163 = sphi 0, %s160
      %s164 = sphi 0, %s163
      %s180 = sphi 0, %s164
      %s188 = sphi 0, %s190
      %s191 = sphi 0, %s188
      %s192 = sphi 0, %s191
      %s208 = sphi 0, %s192
    $region4: #{sixdofnet_forward.1} parent=1 // loop_header_branch
      %16 = sbr.rel (%p14) target = $region8
    $region5: #{sixdofnet_forward.1} parent=1 // loop_body
      %s18 = ssub.s32 %s13, 1
      %s19 = ssub.s32 %s13, 2
      %s29 = sadd.s32 1, %s22
      %p30 = scmp.ge.s32.totalorder %s29, 1
      %s31 = scalar_select %p30, 0, %s29
      %s32 = sadd.s32 1, %s21
      %s33 = scalar_select %p30, %s32, %s21
      %p34 = scmp.ge.s32.totalorder %s33, 2
      %s35 = scalar_select %p34, 0, %s33
      %s36 = sadd.s32 1, %s20
      %s37 = scalar_select %p34, %s36, %s20
      %p38 = scmp.ge.s32.totalorder %s37, 1
      %s39 = scalar_select %p38, 0, %s37
      %s40 = sadd.s32 %s21, %s20
      %s41 = sadd.s32 %s40, %s22
      %s42 = sadd.s32 %s35, %s39
      %s43 = sadd.s32 %s42, %s31
      %s44 = ssub.s32 %s41, %s43
      %p45 = scmp.eq.s32.totalorder %s44, 0
      %s47 = sadd.s32 %s46, 1
      %s48 = scalar_select %p45, %s46, %s47
      %p51 = pneg %p45
      %p52 = scmp.eq.s32.totalorder %s13, 1
      %p53 = por %p51, %p52
      %p54 = scmp.ne.s32.totalorder %s46, %s49
      %p55 = scmp.eq.s32.totalorder %s13, 0
      %p56 = por %p54, %p55
      %p57 = scmp.ne.s32.totalorder %s46, %s49
      %p58 = scmp.eq.s32.totalorder %s18, 1
      %p59 = por %p57, %p58
      %p60 = scmp.ne.s32.totalorder %s49, %s50
      %p61 = scmp.eq.s32.totalorder %s18, 0
      %p62 = por %p60, %p61
      %p63 = scmp.ne.s32.totalorder %s49, %s50
      %p64 = scmp.eq.s32.totalorder %s19, 1
      %p65 = por %p63, %p64
      %p67 = scmp.ne.s32.totalorder %s50, %s66
      %p68 = scmp.eq.s32.totalorder %s19, 0
      %p69 = por %p67, %p68
      %s71 = sadd.s32 %s70, 1
      %p74 = scmp.eq.s32.totalorder %s13, 1
      %p75 = scmp.ne.s32.totalorder %s70, %s72
      %p76 = scmp.eq.s32.totalorder %s13, 0
      %p77 = por %p75, %p76
      %p78 = scmp.ne.s32.totalorder %s70, %s72
      %p79 = scmp.eq.s32.totalorder %s18, 1
      %p80 = por %p78, %p79
      %p81 = scmp.ne.s32.totalorder %s72, %s73
      %p82 = scmp.eq.s32.totalorder %s18, 0
      %p83 = por %p81, %p82
      %p84 = scmp.ne.s32.totalorder %s72, %s73
      %p85 = scmp.eq.s32.totalorder %s19, 1
      %p86 = por %p84, %p85
      %p88 = scmp.ne.s32.totalorder %s73, %s87
      %p89 = scmp.eq.s32.totalorder %s19, 0
      %p90 = por %p88, %p89
      %s92 = sadd.s32 %s91, 1
      %p95 = scmp.eq.s32.totalorder %s13, 1
      %p96 = scmp.ne.s32.totalorder %s91, %s93
      %p97 = scmp.eq.s32.totalorder %s13, 0
      %p98 = por %p96, %p97
      %p99 = scmp.ne.s32.totalorder %s91, %s93
      %p100 = scmp.eq.s32.totalorder %s18, 1
      %p101 = por %p99, %p100
      %p102 = scmp.ne.s32.totalorder %s93, %s94
      %p103 = scmp.eq.s32.totalorder %s18, 0
      %p104 = por %p102, %p103
      %p105 = scmp.ne.s32.totalorder %s93, %s94
      %p106 = scmp.eq.s32.totalorder %s19, 1
      %p107 = por %p105, %p106
      %p109 = scmp.ne.s32.totalorder %s94, %s108
      %p110 = scmp.eq.s32.totalorder %s19, 0
      %p111 = por %p109, %p110
      %s113 = sadd.s32 %s112, 1
      %p116 = scmp.eq.s32.totalorder %s13, 1
      %p117 = scmp.ne.s32.totalorder %s112, %s114
      %p118 = scmp.eq.s32.totalorder %s13, 0
      %p119 = por %p117, %p118
      %p120 = scmp.ne.s32.totalorder %s112, %s114
      %p121 = scmp.eq.s32.totalorder %s18, 1
      %p122 = por %p120, %p121
      %p123 = scmp.ne.s32.totalorder %s114, %s115
      %p124 = scmp.eq.s32.totalorder %s18, 0
      %p125 = por %p123, %p124
      %p126 = scmp.ne.s32.totalorder %s114, %s115
      %p127 = scmp.eq.s32.totalorder %s19, 1
      %p128 = por %p126, %p127
      %p130 = scmp.ne.s32.totalorder %s115, %s129
      %p131 = scmp.eq.s32.totalorder %s19, 0
      %p132 = por %p130, %p131
      %s134 = sadd.s32 %s133, 1
      %p137 = scmp.eq.s32.totalorder %s13, 1
      %p138 = scmp.ne.s32.totalorder %s133, %s135
      %p139 = scmp.eq.s32.totalorder %s13, 0
      %p140 = por %p138, %p139
      %p141 = scmp.ne.s32.totalorder %s133, %s135
      %p142 = scmp.eq.s32.totalorder %s18, 1
      %p143 = por %p141, %p142
      %p144 = scmp.ne.s32.totalorder %s135, %s136
      %p145 = scmp.eq.s32.totalorder %s18, 0
      %p146 = por %p144, %p145
      %p147 = scmp.ne.s32.totalorder %s135, %s136
      %p148 = scmp.eq.s32.totalorder %s19, 1
      %p149 = por %p147, %p148
      %p151 = scmp.ne.s32.totalorder %s136, %s150
      %p152 = scmp.eq.s32.totalorder %s19, 0
      %p153 = por %p151, %p152
      %s154 = sadd.s32 %s21, %s20
      %s155 = sadd.s32 %s154, %s22
      %s156 = sadd.s32 %s35, %s39
      %s157 = sadd.s32 %s156, %s31
      %s158 = ssub.s32 %s155, %s157
      %p159 = scmp.eq.s32.totalorder %s158, 0
      %s161 = sadd.s32 %s160, 1
      %s162 = scalar_select %p159, %s160, %s161
      %p165 = pneg %p159
      %p166 = scmp.eq.s32.totalorder %s13, 1
      %p167 = por %p165, %p166
      %p168 = scmp.ne.s32.totalorder %s160, %s163
      %p169 = scmp.eq.s32.totalorder %s13, 0
      %p170 = por %p168, %p169
      %p171 = scmp.ne.s32.totalorder %s160, %s163
      %p172 = scmp.eq.s32.totalorder %s18, 1
      %p173 = por %p171, %p172
      %p174 = scmp.ne.s32.totalorder %s163, %s164
      %p175 = scmp.eq.s32.totalorder %s18, 0
      %p176 = por %p174, %p175
      %p177 = scmp.ne.s32.totalorder %s163, %s164
      %p178 = scmp.eq.s32.totalorder %s19, 1
      %p179 = por %p177, %p178
      %p181 = scmp.ne.s32.totalorder %s164, %s180
      %p182 = scmp.eq.s32.totalorder %s19, 0
      %p183 = por %p181, %p182
      %s184 = ssub.s32 %s20, %s39
      %s185 = ssub.s32 %s21, %s35
      %s186 = sor.u32 %s184, %s185
      %p187 = scmp.eq.s32.totalorder %s186, 0
      %s189 = sadd.s32 %s188, 1
      %s190 = scalar_select %p187, %s188, %s189
      %p193 = pneg %p187
      %p194 = scmp.eq.s32.totalorder %s13, 1
      %p195 = por %p193, %p194
      %p196 = scmp.ne.s32.totalorder %s188, %s191
      %p197 = scmp.eq.s32.totalorder %s13, 0
      %p198 = por %p196, %p197
      %p199 = scmp.ne.s32.totalorder %s188, %s191
      %p200 = scmp.eq.s32.totalorder %s18, 1
      %p201 = por %p199, %p200
      %p202 = scmp.ne.s32.totalorder %s191, %s192
      %p203 = scmp.eq.s32.totalorder %s18, 0
      %p204 = por %p202, %p203
      %p205 = scmp.ne.s32.totalorder %s191, %s192
      %p206 = scmp.eq.s32.totalorder %s19, 1
      %p207 = por %p205, %p206
      %p209 = scmp.ne.s32.totalorder %s192, %s208
      %p210 = scmp.eq.s32.totalorder %s19, 0
      %p211 = por %p209, %p210
      %p212 = scmp.le.s32.totalorder 1, %s13
      %p213 = scmp.lt.s32.totalorder %s13, 3
      %p214 = pnand %p212, %p213
      %p215 = pneg %p214
      // Predicated region
      $region9: #{sixdofnet_forward.1} parent=5 // pred_check
        _
      $region10: #{sixdofnet_forward.1} parent=5 // pred_check_branch
        %217 = sbr.rel (%p214) target = $region12
      $region11: #{sixdofnet_forward.1} parent=5 // pred_region
        %s218 = ssub.s32 %s13, 1
        // Predicated region
        $region13: #{sixdofnet_forward.1} parent=11 // pred_check
          %p219 = pneg %p83
        $region14: #{sixdofnet_forward.1} parent=11 // pred_check_branch
          %221 = sbr.rel (%p219) target = $region16
        $region15: #{sixdofnet_forward.1} parent=11 // pred_region
          _
        $region16: #{sixdofnet_forward.1} parent=11 // pred_fallthru
          _
        // Predicated region
        $region17: #{sixdofnet_forward.1} parent=11 // pred_check
          %p222 = pneg %p104
        $region18: #{sixdofnet_forward.1} parent=11 // pred_check_branch
          %224 = sbr.rel (%p222) target = $region20
        $region19: #{sixdofnet_forward.1} parent=11 // pred_region
          _
        $region20: #{sixdofnet_forward.1} parent=11 // pred_fallthru
          _
        // Predicated region
        $region21: #{sixdofnet_forward.1} parent=11 // pred_check
          %p225 = pneg %p125
        $region22: #{sixdofnet_forward.1} parent=11 // pred_check_branch
          %227 = sbr.rel (%p225) target = $region24
        $region23: #{sixdofnet_forward.1} parent=11 // pred_region
          _
        $region24: #{sixdofnet_forward.1} parent=11 // pred_fallthru
          _
        // Predicated region
        $region25: #{sixdofnet_forward.1} parent=11 // pred_check
          %p228 = pneg %p146
        $region26: #{sixdofnet_forward.1} parent=11 // pred_check_branch
          %230 = sbr.rel (%p228) target = $region28
        $region27: #{sixdofnet_forward.1} parent=11 // pred_region
          _
        $region28: #{sixdofnet_forward.1} parent=11 // pred_fallthru
          _
      $region12: #{sixdofnet_forward.1} parent=5 // pred_fallthru
        _
      %p231 = scmp.lt.s32.totalorder %s13, 2
      // Predicated region
      $region29: #{sixdofnet_forward.1} parent=5 // pred_check
        %p232 = pneg %p231
      $region30: #{sixdofnet_forward.1} parent=5 // pred_check_branch
        %234 = sbr.rel (%p232) target = $region32
      $region31: #{sixdofnet_forward.1} parent=5 // pred_region
        // Predicated region
        $region33: #{sixdofnet_forward.1} parent=31 // pred_check
          %p235 = pneg %p56
        $region34: #{sixdofnet_forward.1} parent=31 // pred_check_branch
          %237 = sbr.rel (%p235) target = $region36
        $region35: #{sixdofnet_forward.1} parent=31 // pred_region
          %s238 = sand.u32 %s46, 1
          %s239 = sand.u32 %s46, 1
          %s240 = smul.addr %s239, 32
          %s241 = scalar_lea.vmem [#allocation2], %s240
          %s242 = sadd.s32 %s21, %s20
          %s243 = sadd.s32 %s242, %s22
          %s244 = smul.u32 2, %s243
          %s245 = smul.addr %s244, 4
          %s246 = scalar_lea.vmem %s0, %s245
          // Predicated region
          $region37: #{sixdofnet_forward.1} parent=35 // pred_check
            _
          $region38: #{sixdofnet_forward.1} parent=35 // pred_check_branch
            %248 = sbr.rel (0) target = $region40
          $region39: #{sixdofnet_forward.1} parent=35 // pred_region
            // Predicated region
            $region41: #{sixdofnet_forward.1} parent=39 // pred_check
              _
            $region42: #{sixdofnet_forward.1} parent=39 // pred_check_branch
              %250 = sbr.rel (0) target = $region44
            $region43: #{sixdofnet_forward.1} parent=39 // pred_region
              // Predicated region
              $region56: #{sixdofnet_forward.1} parent=43 // pred_check
                _
              $region57: #{sixdofnet_forward.1} parent=43 // pred_check_branch
                %272 = sbr.rel (0) target = $region59
              $region58: #{sixdofnet_forward.1} parent=43 // pred_region
                loop: start=0, step=1, limit=1
                $region60: #{sixdofnet_forward.1} parent=58 // loop_pre_header
                  _
                $region61: #{sixdofnet_forward.1} parent=58 // loop_header
                  %s274 = sphi 0, %s278
                  %p275 = scmp.ge.s32.totalorder %s274, 1
                  %s279 = sphi %s246, %s246
                  %s280 = sphi %s241, %s241
                $region62: #{sixdofnet_forward.1} parent=58 // loop_header_branch
                  %277 = sbr.rel (%p275) target = $region66
                $region63: #{sixdofnet_forward.1} parent=58 // loop_body
                  %v281 = vld [vmem:[%s279] sm:$0xff]
                  %282 = vst [vmem:[%s280] sm:$0xff] %v281
                  %v283 = vld [vmem:[%s279 + $0x10] sm:$0xff]
                  %284 = vst [vmem:[%s280 + $0x8] sm:$0xff] %v283
                  %v285 = vld [vmem:[%s279 + $0x20] sm:$0xff]
                  %286 = vst [vmem:[%s280 + $0x10] sm:$0xff] %v285
                  %v287 = vld [vmem:[%s279 + $0x30] sm:$0xff]
                  %288 = vst [vmem:[%s280 + $0x18] sm:$0xff] %v287
                $region64: #{sixdofnet_forward.1} parent=58 // loop_footer
                  %s278 = sadd.s32 1, %s274
                $region65: #{sixdofnet_forward.1} parent=58 // loop_footer_branch
                  %273 = sbr.rel target = $region61
                $region66: #{sixdofnet_forward.1} parent=58 // loop_exit
                  _
              $region59: #{sixdofnet_forward.1} parent=43 // pred_fallthru
                _
              // Predicated region
              $region67: #{sixdofnet_forward.1} parent=43 // pred_check
                _
              $region68: #{sixdofnet_forward.1} parent=43 // pred_check_branch
                %290 = sbr.rel target = $region70
              $region69: #{sixdofnet_forward.1} parent=43 // pred_region
                _
              $region70: #{sixdofnet_forward.1} parent=43 // pred_fallthru
                _
            $region44: #{sixdofnet_forward.1} parent=39 // pred_fallthru
              _
            // Predicated region
            $region45: #{sixdofnet_forward.1} parent=39 // pred_check
              _
            $region46: #{sixdofnet_forward.1} parent=39 // pred_check_branch
              %252 = sbr.rel target = $region48
            $region47: #{sixdofnet_forward.1} parent=39 // pred_region
              %s254 = ssub.s32 256, 1
              loop: start=0, step=1, limit=1
              $region49: #{sixdofnet_forward.1} parent=47 // loop_pre_header
                _
              $region50: #{sixdofnet_forward.1} parent=47 // loop_header
                %s256 = sphi 0, %s260
                %p257 = scmp.ge.s32.totalorder %s256, 1
                %s261 = sphi %s246, %s246
                %s262 = sphi %s241, %s241
              $region51: #{sixdofnet_forward.1} parent=47 // loop_header_branch
                %259 = sbr.rel (%p257) target = $region55
              $region52: #{sixdofnet_forward.1} parent=47 // loop_body
                %v263 = vld [vmem:[%s261] sm:%s254]
                %264 = vst [vmem:[%s262] sm:%s254] %v263
                %v265 = vld [vmem:[%s261 + $0x10] sm:%s254]
                %266 = vst [vmem:[%s262 + $0x8] sm:%s254] %v265
                %v267 = vld [vmem:[%s261 + $0x20] sm:%s254]
                %268 = vst [vmem:[%s262 + $0x10] sm:%s254] %v267
                %v269 = vld [vmem:[%s261 + $0x30] sm:%s254]
                %270 = vst [vmem:[%s262 + $0x18] sm:%s254] %v269
              $region53: #{sixdofnet_forward.1} parent=47 // loop_footer
                %s260 = sadd.s32 1, %s256
              $region54: #{sixdofnet_forward.1} parent=47 // loop_footer_branch
                %255 = sbr.rel target = $region50
              $region55: #{sixdofnet_forward.1} parent=47 // loop_exit
                _
            $region48: #{sixdofnet_forward.1} parent=39 // pred_fallthru
              _
          $region40: #{sixdofnet_forward.1} parent=35 // pred_fallthru
            _
          %291 = vnop
        $region36: #{sixdofnet_forward.1} parent=31 // pred_fallthru
          _
      $region32: #{sixdofnet_forward.1} parent=5 // pred_fallthru
        _
      %p292 = scmp.le.s32.totalorder 1, %s13
      %p293 = scmp.lt.s32.totalorder %s13, 3
      %p294 = pnand %p292, %p293
      %p295 = pneg %p294
      // Predicated region
      $region71: #{sixdofnet_forward.1} parent=5 // pred_check
        _
      $region72: #{sixdofnet_forward.1} parent=5 // pred_check_branch
        %297 = sbr.rel (%p294) target = $region74
      $region73: #{sixdofnet_forward.1} parent=5 // pred_region
        %s298 = ssub.s32 %s13, 1
        %s299 = sand.u32 %s49, 1
        %s300 = sand.u32 %s49, 1
        %s301 = smul.addr %s300, 32
        %s302 = scalar_lea.vmem [#allocation2], %s301
        // Predicated region
        $region75: #{sixdofnet_forward.1} parent=73 // pred_check
          %p303 = pneg %p62
        $region76: #{sixdofnet_forward.1} parent=73 // pred_check_branch
          %305 = sbr.rel (%p303) target = $region78
        $region77: #{sixdofnet_forward.1} parent=73 // pred_region
          _
        $region78: #{sixdofnet_forward.1} parent=73 // pred_fallthru
          _
        %s306 = sand.u32 %s49, 1
        %s307 = sand.u32 %s49, 1
        %s308 = smul.addr %s307, 32
        %s309 = scalar_lea.vmem [#allocation2], %s308
        %p310 = pneg %p62
        %p311 = pneg %p59
        %p312 = pneg %p83
        %p313 = pneg %p80
        %p314 = pneg %p104
        %p315 = pneg %p101
        %p316 = pneg %p125
        %p317 = pneg %p122
        %p318 = pneg %p146
        %p319 = pneg %p143
        %p320 = pneg %p176
        %p321 = pneg %p173
        %s322 = sadd.s32 %s24, %s23
        %s323 = sadd.s32 %s322, %s25
        %s324 = smul.u32 2, %s323
        %p325 = scmp.lt.s32.totalorder %s324, 3
        %s326 = scalar_select %p325, %s324, 3
        %s327 = scalar_lea.vmem %s5, %s326
        %p328 = pneg %p204
        %p329 = pneg %p201
        %p330 = scmp.lt.s32.totalorder %s23, 0
        %s331 = scalar_select %p330, %s23, 0
        %p332 = scmp.lt.s32.totalorder %s24, 1
        %s333 = scalar_select %p332, %s24, 1
        %s334 = smul.addr %s333, 16
        %s335 = smul.addr %s331, 32
        %s336 = sadd.s32 %s334, %s335
        %s337 = smul.addr %s336, 8
        %s338 = scalar_lea.vmem %s6, %s337
        %s339 = sadd.s32 %s24, %s23
        %s340 = sadd.s32 %s339, %s25
        %s341 = smul.u32 2, %s340
        %s342 = sadd.s32 %s24, %s23
        %s343 = sadd.s32 %s342, %s25
        %s344 = smul.u32 2, %s343
        %p345 = scmp.lt.s32.totalorder %s344, 3
        %s346 = scalar_select %p345, %s344, 3
        %s347 = scalar_lea.vmem %s5, %s346
        %s348 = sadd.s32 %s24, %s23
        %s349 = sadd.s32 %s348, %s25
        %s350 = smul.u32 2, %s349
        %p351 = scmp.lt.s32.totalorder %s23, 0
        %s352 = scalar_select %p351, %s23, 0
        %p353 = scmp.lt.s32.totalorder %s24, 1
        %s354 = scalar_select %p353, %s24, 1
        %s355 = smul.addr %s354, 16
        %s356 = smul.addr %s352, 32
        %s357 = sadd.s32 %s355, %s356
        %s358 = smul.addr %s357, 8
        %s359 = scalar_lea.vmem %s6, %s358
        %v361 = vld [vmem:[%s1] sm:$0xf]
        %v362 = vld [vmem:[%s1 + $0x4] sm:$0xf]
        %v363 = vld [vmem:[%s1 + $0x8] sm:$0xf]
        %v364 = vld [vmem:[%s1 + $0xc] sm:$0xf]
        %v365 = vld [vmem:[%s1 + $0x10] sm:$0xf]
        %v366 = vld [vmem:[%s1 + $0x14] sm:$0xf]
        %v367 = vld [vmem:[%s1 + $0x18] sm:$0xf]
        %v368 = vld [vmem:[%s1 + $0x1c] sm:$0xf]
        %v369 = vld [vmem:[%s1 + $0x20] sm:$0xf]
        %v370 = vld [vmem:[%s1 + $0x24] sm:$0xf]
        %v371 = vld [vmem:[%s1 + $0x28] sm:$0xf]
        %v372 = vld [vmem:[%s1 + $0x2c] sm:$0xf]
        %v373 = vld [vmem:[%s1 + $0x30] sm:$0xf]
        %v374 = vld [vmem:[%s1 + $0x34] sm:$0xf]
        %v375 = vld [vmem:[%s1 + $0x38] sm:$0xf]
        %v376 = vld [vmem:[%s1 + $0x3c] sm:$0xf]
        %v377 = vld [vmem:[%s302] sm:$0xff]
        %v378 = vld [vmem:[%s302 + $0x8] sm:$0xff]
        %v379 = vld [vmem:[%s302 + $0x10] sm:$0xff]
        %v380 = vld [vmem:[%s302 + $0x18] sm:$0xff]
        %v381 = vld [vmem:[%s2] sm:$0xff]
        %v382 = vld [vmem:[%s2 + $0x8] sm:$0xff]
        %v383 = vld [vmem:[%s2 + $0x10] sm:$0xff]
        %v384 = vld [vmem:[%s2 + $0x18] sm:$0xff]
        %v385 = vld [vmem:[%s2 + $0x20] sm:$0xff]
        %v386 = vld [vmem:[%s2 + $0x28] sm:$0xff]
        %v387 = vld [vmem:[%s2 + $0x30] sm:$0xff]
        %v388 = vld [vmem:[%s2 + $0x38] sm:$0xff]
        %v389 = vld [vmem:[%s2 + $0x40] sm:$0xff]
        %v390 = vld [vmem:[%s2 + $0x48] sm:$0xff]
        %v391 = vld [vmem:[%s2 + $0x50] sm:$0xff]
        %v392 = vld [vmem:[%s2 + $0x58] sm:$0xff]
        %v393 = vld [vmem:[%s2 + $0x60] sm:$0xff]
        %v394 = vld [vmem:[%s2 + $0x68] sm:$0xff]
        %v395 = vld [vmem:[%s2 + $0x70] sm:$0xff]
        %v396 = vld [vmem:[%s2 + $0x78] sm:$0xff]
        %398 = vset.pattern.permute.xlu0 0
        %399 = vperm.xlu0 %398, %v381
        %v400 = vpop.permute.xlu0 %399
        %403 = vset.pattern.permute.xlu0 0
        %404 = vperm.xlu0 %403, %v382
        %v405 = vpop.permute.xlu0 %404
        %408 = vset.pattern.permute.xlu0 0
        %409 = vperm.xlu0 %408, %v383
        %v410 = vpop.permute.xlu0 %409
        %413 = vset.pattern.permute.xlu0 0
        %414 = vperm.xlu0 %413, %v384
        %v415 = vpop.permute.xlu0 %414
        %418 = vset.pattern.permute.xlu0 0
        %419 = vperm.xlu0 %418, %v385
        %v420 = vpop.permute.xlu0 %419
        %423 = vset.pattern.permute.xlu0 0
        %424 = vperm.xlu0 %423, %v386
        %v425 = vpop.permute.xlu0 %424
        %428 = vset.pattern.permute.xlu0 0
        %429 = vperm.xlu0 %428, %v387
        %v430 = vpop.permute.xlu0 %429
        %433 = vset.pattern.permute.xlu0 0
        %434 = vperm.xlu0 %433, %v388
        %v435 = vpop.permute.xlu0 %434
        %438 = vset.pattern.permute.xlu0 0
        %439 = vperm.xlu0 %438, %v389
        %v440 = vpop.permute.xlu0 %439
        %443 = vset.pattern.permute.xlu0 0
        %444 = vperm.xlu0 %443, %v390
        %v445 = vpop.permute.xlu0 %444
        %448 = vset.pattern.permute.xlu0 0
        %449 = vperm.xlu0 %448, %v391
        %v450 = vpop.permute.xlu0 %449
        %453 = vset.pattern.permute.xlu0 0
        %454 = vperm.xlu0 %453, %v392
        %v455 = vpop.permute.xlu0 %454
        %458 = vset.pattern.permute.xlu0 0
        %459 = vperm.xlu0 %458, %v393
        %v460 = vpop.permute.xlu0 %459
        %463 = vset.pattern.permute.xlu0 0
        %464 = vperm.xlu0 %463, %v394
        %v465 = vpop.permute.xlu0 %464
        %468 = vset.pattern.permute.xlu0 0
        %469 = vperm.xlu0 %468, %v395
        %v470 = vpop.permute.xlu0 %469
        %473 = vset.pattern.permute.xlu0 0
        %474 = vperm.xlu0 %473, %v396
        %v475 = vpop.permute.xlu0 %474
        %v493 = vunpack.c.l.b16 %v361
        %v494 = vunpack.c.l.b16 %v362
        %v495 = vunpack.c.l.b16 %v363
        %v496 = vunpack.c.l.b16 %v364
        %v497 = vunpack.c.l.b16 %v365
        %v498 = vunpack.c.l.b16 %v366
        %v499 = vunpack.c.l.b16 %v367
        %v500 = vunpack.c.l.b16 %v368
        %v501 = vunpack.c.l.b16 %v369
        %v502 = vunpack.c.l.b16 %v370
        %v503 = vunpack.c.l.b16 %v371
        %v504 = vunpack.c.l.b16 %v372
        %v505 = vunpack.c.l.b16 %v373
        %v506 = vunpack.c.l.b16 %v374
        %v507 = vunpack.c.l.b16 %v375
        %v508 = vunpack.c.l.b16 %v376
        %v509 = vpack.c.b16 %v494, %v493
        %v510 = vpack.c.b16 %v496, %v495
        %v511 = vpack.c.b16 %v498, %v497
        %v512 = vpack.c.b16 %v500, %v499
        %v513 = vpack.c.b16 %v502, %v501
        %v514 = vpack.c.b16 %v504, %v503
        %v515 = vpack.c.b16 %v506, %v505
        %v516 = vpack.c.b16 %v508, %v507
        %v521 = vunpack.c.l.b16 %v377
        %v522 = vunpack.c.h.b16 %v377
        %v523 = vunpack.c.l.b16 %v378
        %v524 = vunpack.c.h.b16 %v378
        %v525 = vunpack.c.l.b16 %v379
        %v526 = vunpack.c.h.b16 %v379
        %v527 = vunpack.c.l.b16 %v380
        %v528 = vunpack.c.h.b16 %v380
        %v529 = vpack.c.b16 %v523, %v521
        %v530 = vpack.c.b16 %v524, %v522
        %v531 = vpack.c.b16 %v527, %v525
        %v532 = vpack.c.b16 %v528, %v526
        %vm537 = vcmask 261120
        %v539 = vsel %vm537, %v509, 0
        %v542 = vsel %vm537, %v510, 0
        %v545 = vsel %vm537, %v511, 0
        %v548 = vsel %vm537, %v512, 0
        %v551 = vsel %vm537, %v513, 0
        %v554 = vsel %vm537, %v514, 0
        %v557 = vsel %vm537, %v515, 0
        %v560 = vsel %vm537, %v516, 0
        %562 = vmatpush.bf16.msra.mxu0 0
        %563 = vmatpush.bf16.msra.mxu0 0
        %564 = vmatpush.bf16.msra.mxu0 0
        %565 = vmatpush.bf16.msra.mxu0 0
        %566 = vmatpush.bf16.msra.mxu0 0
        %567 = vmatpush.bf16.msra.mxu0 0
        %568 = vmatpush.bf16.msra.mxu0 %v531
        %569 = vmatpush.bf16.msra.mxu0 %v529
        %570 = vmatmul.bf16.gmra.mxu0 %v539
        %v571 = vpop.f32.mrf.mxu0
        %v572 = vadd.f32 %v400, %v571
        %v573 = vpop.f32.mrf.mxu0
        %v574 = vadd.f32 %v405, %v573
        %575 = vmatmul.bf16.gmra.mxu0 %v542
        %v576 = vpop.f32.mrf.mxu0
        %v577 = vadd.f32 %v410, %v576
        %v578 = vpop.f32.mrf.mxu0
        %v579 = vadd.f32 %v415, %v578
        %580 = vmatmul.bf16.gmra.mxu0 %v545
        %v581 = vpop.f32.mrf.mxu0
        %v582 = vadd.f32 %v420, %v581
        %v583 = vpop.f32.mrf.mxu0
        %v584 = vadd.f32 %v425, %v583
        %585 = vmatmul.bf16.gmra.mxu0 %v548
        %v586 = vpop.f32.mrf.mxu0
        %v587 = vadd.f32 %v430, %v586
        %v588 = vpop.f32.mrf.mxu0
        %v589 = vadd.f32 %v435, %v588
        %590 = vmatmul.bf16.gmra.mxu0 %v551
        %v591 = vpop.f32.mrf.mxu0
        %v592 = vadd.f32 %v440, %v591
        %v593 = vpop.f32.mrf.mxu0
        %v594 = vadd.f32 %v445, %v593
        %595 = vmatmul.bf16.gmra.mxu0 %v554
        %v596 = vpop.f32.mrf.mxu0
        %v597 = vadd.f32 %v450, %v596
        %v598 = vpop.f32.mrf.mxu0
        %v599 = vadd.f32 %v455, %v598
        %600 = vmatmul.bf16.gmra.mxu0 %v557
        %v601 = vpop.f32.mrf.mxu0
        %v602 = vadd.f32 %v460, %v601
        %v603 = vpop.f32.mrf.mxu0
        %v604 = vadd.f32 %v465, %v603
        %605 = vmatmul.bf16.gmra.mxu0 %v560
        %v606 = vpop.f32.mrf.mxu0
        %v607 = vadd.f32 %v470, %v606
        %v608 = vpop.f32.mrf.mxu0
        %v609 = vadd.f32 %v475, %v608
        %610 = vdwg.mxu0
        %611 = vmatpush.bf16.msra.mxu0 0
        %612 = vmatpush.bf16.msra.mxu0 0
        %613 = vmatpush.bf16.msra.mxu0 0
        %614 = vmatpush.bf16.msra.mxu0 0
        %615 = vmatpush.bf16.msra.mxu0 0
        %616 = vmatpush.bf16.msra.mxu0 0
        %617 = vmatpush.bf16.msra.mxu0 %v532
        %618 = vmatpush.bf16.msra.mxu0 %v530
        %619 = vmatmul.bf16.gmra.mxu0 %v539
        %v620 = vpop.f32.mrf.mxu0
        %v621 = vadd.f32 %v400, %v620
        %v622 = vpop.f32.mrf.mxu0
        %v623 = vadd.f32 %v405, %v622
        %624 = vmatmul.bf16.gmra.mxu0 %v542
        %v625 = vpop.f32.mrf.mxu0
        %v626 = vadd.f32 %v410, %v625
        %v627 = vpop.f32.mrf.mxu0
        %v628 = vadd.f32 %v415, %v627
        %629 = vmatmul.bf16.gmra.mxu0 %v545
        %v630 = vpop.f32.mrf.mxu0
        %v631 = vadd.f32 %v420, %v630
        %v632 = vpop.f32.mrf.mxu0
        %v633 = vadd.f32 %v425, %v632
        %634 = vmatmul.bf16.gmra.mxu0 %v548
        %v635 = vpop.f32.mrf.mxu0
        %v636 = vadd.f32 %v430, %v635
        %v637 = vpop.f32.mrf.mxu0
        %v638 = vadd.f32 %v435, %v637
        %639 = vmatmul.bf16.gmra.mxu0 %v551
        %v640 = vpop.f32.mrf.mxu0
        %v641 = vadd.f32 %v440, %v640
        %v642 = vpop.f32.mrf.mxu0
        %v643 = vadd.f32 %v445, %v642
        %644 = vmatmul.bf16.gmra.mxu0 %v554
        %v645 = vpop.f32.mrf.mxu0
        %v646 = vadd.f32 %v450, %v645
        %v647 = vpop.f32.mrf.mxu0
        %v648 = vadd.f32 %v455, %v647
        %649 = vmatmul.bf16.gmra.mxu0 %v557
        %v650 = vpop.f32.mrf.mxu0
        %v651 = vadd.f32 %v460, %v650
        %v652 = vpop.f32.mrf.mxu0
        %v653 = vadd.f32 %v465, %v652
        %654 = vmatmul.bf16.gmra.mxu0 %v560
        %v655 = vpop.f32.mrf.mxu0
        %v656 = vadd.f32 %v470, %v655
        %v657 = vpop.f32.mrf.mxu0
        %v658 = vadd.f32 %v475, %v657
        %659 = vdwg.mxu0
        %v660 = vmax.f32 %v572, 0.0
        %v661 = vmax.f32 %v621, 0.0
        %v662 = vmax.f32 %v574, 0.0
        %v663 = vmax.f32 %v623, 0.0
        %v664 = vmax.f32 %v577, 0.0
        %v665 = vmax.f32 %v626, 0.0
        %v666 = vmax.f32 %v579, 0.0
        %v667 = vmax.f32 %v628, 0.0
        %v668 = vmax.f32 %v582, 0.0
        %v669 = vmax.f32 %v631, 0.0
        %v670 = vmax.f32 %v584, 0.0
        %v671 = vmax.f32 %v633, 0.0
        %v672 = vmax.f32 %v587, 0.0
        %v673 = vmax.f32 %v636, 0.0
        %v674 = vmax.f32 %v589, 0.0
        %v675 = vmax.f32 %v638, 0.0
        %v676 = vmax.f32 %v592, 0.0
        %v677 = vmax.f32 %v641, 0.0
        %v678 = vmax.f32 %v594, 0.0
        %v679 = vmax.f32 %v643, 0.0
        %v680 = vmax.f32 %v597, 0.0
        %v681 = vmax.f32 %v646, 0.0
        %v682 = vmax.f32 %v599, 0.0
        %v683 = vmax.f32 %v648, 0.0
        %v684 = vmax.f32 %v602, 0.0
        %v685 = vmax.f32 %v651, 0.0
        %v686 = vmax.f32 %v604, 0.0
        %v687 = vmax.f32 %v653, 0.0
        %v688 = vmax.f32 %v607, 0.0
        %v689 = vmax.f32 %v656, 0.0
        %v690 = vmax.f32 %v609, 0.0
        %v691 = vmax.f32 %v658, 0.0
        %v692 = vld [vmem:[%s3] sm:$0x3]
        %v693 = vld [vmem:[%s4] sm:$0x3]
        %695 = vset.pattern.permute.xlu0 0
        %696 = vperm.xlu0 %695, %v693
        %v697 = vpop.permute.xlu0 %696
        %699 = vmatpush.msra.mxu0 %v690
        %700 = vmatpush.msra.mxu0 %v688
        %701 = vmatpush.msra.mxu0 %v686
        %702 = vmatpush.msra.mxu0 %v684
        %703 = vmatpush.msra.mxu0 %v682
        %704 = vmatpush.msra.mxu0 %v680
        %705 = vmatpush.msra.mxu0 %v678
        %706 = vmatpush.msra.mxu0 %v676
        %707 = vmatpush.msra.mxu0 %v674
        %708 = vmatpush.msra.mxu0 %v672
        %709 = vmatpush.msra.mxu0 %v670
        %710 = vmatpush.msra.mxu0 %v668
        %711 = vmatpush.msra.mxu0 %v666
        %712 = vmatpush.msra.mxu0 %v664
        %713 = vmatpush.msra.mxu0 %v662
        %714 = vmatpush.msra.mxu0 %v660
        %715 = vmatmul.f32.gmra.mxu0 %v692
        %v716 = vpop.f32.mrf.mxu0
        %v717 = vadd.f32 %v697, %v716
        %718 = vdwg.mxu0
        %719 = vmatpush.msra.mxu0 %v691
        %720 = vmatpush.msra.mxu0 %v689
        %721 = vmatpush.msra.mxu0 %v687
        %722 = vmatpush.msra.mxu0 %v685
        %723 = vmatpush.msra.mxu0 %v683
        %724 = vmatpush.msra.mxu0 %v681
        %725 = vmatpush.msra.mxu0 %v679
        %726 = vmatpush.msra.mxu0 %v677
        %727 = vmatpush.msra.mxu0 %v675
        %728 = vmatpush.msra.mxu0 %v673
        %729 = vmatpush.msra.mxu0 %v671
        %730 = vmatpush.msra.mxu0 %v669
        %731 = vmatpush.msra.mxu0 %v667
        %732 = vmatpush.msra.mxu0 %v665
        %733 = vmatpush.msra.mxu0 %v663
        %734 = vmatpush.msra.mxu0 %v661
        %735 = vmatmul.f32.gmra.mxu0 %v692
        %v736 = vpop.f32.mrf.mxu0
        %v737 = vadd.f32 %v697, %v736
        %738 = vdwg.mxu0
        %v739 = vxor.u32 %v717, 2147483648
        %v740 = vxor.u32 %v737, 2147483648
        %v741 = vmul.f32 %v739, 1.442695
        %v742 = vpow.pop %v741
        %v743 = vmul.f32 %v740, 1.442695
        %v744 = vpow.pop %v743
        %v745 = vadd.f32 %v742, 1.0
        %v746 = vadd.f32 %v744, 1.0
        %v747 = vrcp.pop %v745
        %v748 = vmul.f32 %v745, %v747
        %v749 = vsub.f32 1.0, %v748
        %v750 = vmul.f32 %v747, %v749
        %v751 = vadd.f32 %v747, %v750
        %vm752 = vweird.f32 %v745
        %vm753 = vweird.f32 %v747
        %vm754 = vmor %vm752, %vm753
        %v755 = vsel %vm754, %v747, %v751
        %v756 = vand.u32 2147483647, %v745
        %vm757 = vcmp.eq.f32.partialorder %v756, 8.507059e+37
        %v758 = vand.u32 %v745, 2147483648
        %v759 = vor.u32 1.1754944e-38, %v758
        %v760 = vsel %vm757, %v759, %v755
        %v761 = vmul.f32 1.0, %v760
        %v762 = vrcp.pop %v746
        %v763 = vmul.f32 %v746, %v762
        %v764 = vsub.f32 1.0, %v763
        %v765 = vmul.f32 %v762, %v764
        %v766 = vadd.f32 %v762, %v765
        %vm767 = vweird.f32 %v746
        %vm768 = vweird.f32 %v762
        %vm769 = vmor %vm767, %vm768
        %v770 = vsel %vm769, %v762, %v766
        %v771 = vand.u32 2147483647, %v746
        %vm772 = vcmp.eq.f32.partialorder %v771, 8.507059e+37
        %v773 = vand.u32 %v746, 2147483648
        %v774 = vor.u32 1.1754944e-38, %v773
        %v775 = vsel %vm772, %v774, %v770
        %v776 = vmul.f32 1.0, %v775
        %v777 = vpack.c.bf16 %v776, %v761
        %v779 = vrot.slane %v777, 3
        %vm780 = vcmask 1040384
        %v783 = vsel %vm780, %v777, %v779
        %785 = vst [vmem:[%s347] sm:$0x3] %v783
        %p786 = scmp.eq.s32.totalorder %s25, 0
        // Predicated region
        $region79: #{sixdofnet_forward.1} parent=73 // pred_check
          %p787 = pneg %p786
        $region80: #{sixdofnet_forward.1} parent=73 // pred_check_branch
          %789 = sbr.rel (%p787) target = $region82
        $region81: #{sixdofnet_forward.1} parent=73 // pred_region
          %vm790 = vcmask 7168
          %791 = vst.msk [vmem:[%s359] sm:$0xff] %vm790, 0.0
          %792 = vst.msk [vmem:[%s359 + $0x8] sm:$0xff] %vm790, 0.0
          %793 = vst.msk [vmem:[%s359 + $0x10] sm:$0xff] %vm790, 0.0
          %794 = vst.msk [vmem:[%s359 + $0x18] sm:$0xff] %vm790, 0.0
          %795 = vst.msk [vmem:[%s359 + $0x20] sm:$0xff] %vm790, 0.0
          %796 = vst.msk [vmem:[%s359 + $0x28] sm:$0xff] %vm790, 0.0
          %797 = vst.msk [vmem:[%s359 + $0x30] sm:$0xff] %vm790, 0.0
          %798 = vst.msk [vmem:[%s359 + $0x38] sm:$0xff] %vm790, 0.0
          %799 = vst.msk [vmem:[%s359 + $0x40] sm:$0xff] %vm790, 0.0
          %800 = vst.msk [vmem:[%s359 + $0x48] sm:$0xff] %vm790, 0.0
          %801 = vst.msk [vmem:[%s359 + $0x50] sm:$0xff] %vm790, 0.0
          %802 = vst.msk [vmem:[%s359 + $0x58] sm:$0xff] %vm790, 0.0
          %803 = vst.msk [vmem:[%s359 + $0x60] sm:$0xff] %vm790, 0.0
          %804 = vst.msk [vmem:[%s359 + $0x68] sm:$0xff] %vm790, 0.0
          %805 = vst.msk [vmem:[%s359 + $0x70] sm:$0xff] %vm790, 0.0
          %806 = vst.msk [vmem:[%s359 + $0x78] sm:$0xff] %vm790, 0.0
        $region82: #{sixdofnet_forward.1} parent=73 // pred_fallthru
          _
        %v807 = vld [vmem:[%s359] sm:$0xff]
        %v808 = vld [vmem:[%s359 + $0x8] sm:$0xff]
        %v809 = vld [vmem:[%s359 + $0x10] sm:$0xff]
        %v810 = vld [vmem:[%s359 + $0x18] sm:$0xff]
        %v811 = vld [vmem:[%s359 + $0x20] sm:$0xff]
        %v812 = vld [vmem:[%s359 + $0x28] sm:$0xff]
        %v813 = vld [vmem:[%s359 + $0x30] sm:$0xff]
        %v814 = vld [vmem:[%s359 + $0x38] sm:$0xff]
        %v815 = vld [vmem:[%s359 + $0x40] sm:$0xff]
        %v816 = vld [vmem:[%s359 + $0x48] sm:$0xff]
        %v817 = vld [vmem:[%s359 + $0x50] sm:$0xff]
        %v818 = vld [vmem:[%s359 + $0x58] sm:$0xff]
        %v819 = vld [vmem:[%s359 + $0x60] sm:$0xff]
        %v820 = vld [vmem:[%s359 + $0x68] sm:$0xff]
        %v821 = vld [vmem:[%s359 + $0x70] sm:$0xff]
        %v822 = vld [vmem:[%s359 + $0x78] sm:$0xff]
        %v823 = vadd.f32 %v660, %v661
        %824 = vadd.xlane.f32.xlu0 %v823
        %v825 = vpop.xlane.xlu0 %824
        %v826 = vadd.f32 %v662, %v663
        %827 = vadd.xlane.f32.xlu0 %v826
        %v828 = vpop.xlane.xlu0 %827
        %v829 = vadd.f32 %v664, %v665
        %830 = vadd.xlane.f32.xlu0 %v829
        %v831 = vpop.xlane.xlu0 %830
        %v832 = vadd.f32 %v666, %v667
        %833 = vadd.xlane.f32.xlu0 %v832
        %v834 = vpop.xlane.xlu0 %833
        %v835 = vadd.f32 %v668, %v669
        %836 = vadd.xlane.f32.xlu0 %v835
        %v837 = vpop.xlane.xlu0 %836
        %v838 = vadd.f32 %v670, %v671
        %839 = vadd.xlane.f32.xlu0 %v838
        %v840 = vpop.xlane.xlu0 %839
        %v841 = vadd.f32 %v672, %v673
        %842 = vadd.xlane.f32.xlu0 %v841
        %v843 = vpop.xlane.xlu0 %842
        %v844 = vadd.f32 %v674, %v675
        %845 = vadd.xlane.f32.xlu0 %v844
        %v846 = vpop.xlane.xlu0 %845
        %v847 = vadd.f32 %v676, %v677
        %848 = vadd.xlane.f32.xlu0 %v847
        %v849 = vpop.xlane.xlu0 %848
        %v850 = vadd.f32 %v678, %v679
        %851 = vadd.xlane.f32.xlu0 %v850
        %v852 = vpop.xlane.xlu0 %851
        %v853 = vadd.f32 %v680, %v681
        %854 = vadd.xlane.f32.xlu0 %v853
        %v855 = vpop.xlane.xlu0 %854
        %v856 = vadd.f32 %v682, %v683
        %857 = vadd.xlane.f32.xlu0 %v856
        %v858 = vpop.xlane.xlu0 %857
        %v859 = vadd.f32 %v684, %v685
        %860 = vadd.xlane.f32.xlu0 %v859
        %v861 = vpop.xlane.xlu0 %860
        %v862 = vadd.f32 %v686, %v687
        %863 = vadd.xlane.f32.xlu0 %v862
        %v864 = vpop.xlane.xlu0 %863
        %v865 = vadd.f32 %v688, %v689
        %866 = vadd.xlane.f32.xlu0 %v865
        %v867 = vpop.xlane.xlu0 %866
        %v868 = vadd.f32 %v690, %v691
        %869 = vadd.xlane.f32.xlu0 %v868
        %v870 = vpop.xlane.xlu0 %869
        %v871 = vadd.f32 %v807, %v825
        %v872 = vadd.f32 %v808, %v828
        %v873 = vadd.f32 %v809, %v831
        %v874 = vadd.f32 %v810, %v834
        %v875 = vadd.f32 %v811, %v837
        %v876 = vadd.f32 %v812, %v840
        %v877 = vadd.f32 %v813, %v843
        %v878 = vadd.f32 %v814, %v846
        %v879 = vadd.f32 %v815, %v849
        %v880 = vadd.f32 %v816, %v852
        %v881 = vadd.f32 %v817, %v855
        %v882 = vadd.f32 %v818, %v858
        %v883 = vadd.f32 %v819, %v861
        %v884 = vadd.f32 %v820, %v864
        %v885 = vadd.f32 %v821, %v867
        %v886 = vadd.f32 %v822, %v870
        %vm887 = vcmask 7168
        %888 = vst.msk [vmem:[%s359] sm:$0xff] %vm887, %v871
        %889 = vst.msk [vmem:[%s359 + $0x8] sm:$0xff] %vm887, %v872
        %890 = vst.msk [vmem:[%s359 + $0x10] sm:$0xff] %vm887, %v873
        %891 = vst.msk [vmem:[%s359 + $0x18] sm:$0xff] %vm887, %v874
        %892 = vst.msk [vmem:[%s359 + $0x20] sm:$0xff] %vm887, %v875
        %893 = vst.msk [vmem:[%s359 + $0x28] sm:$0xff] %vm887, %v876
        %894 = vst.msk [vmem:[%s359 + $0x30] sm:$0xff] %vm887, %v877
        %895 = vst.msk [vmem:[%s359 + $0x38] sm:$0xff] %vm887, %v878
        %896 = vst.msk [vmem:[%s359 + $0x40] sm:$0xff] %vm887, %v879
        %897 = vst.msk [vmem:[%s359 + $0x48] sm:$0xff] %vm887, %v880
        %898 = vst.msk [vmem:[%s359 + $0x50] sm:$0xff] %vm887, %v881
        %899 = vst.msk [vmem:[%s359 + $0x58] sm:$0xff] %vm887, %v882
        %900 = vst.msk [vmem:[%s359 + $0x60] sm:$0xff] %vm887, %v883
        %901 = vst.msk [vmem:[%s359 + $0x68] sm:$0xff] %vm887, %v884
        %902 = vst.msk [vmem:[%s359 + $0x70] sm:$0xff] %vm887, %v885
        %903 = vst.msk [vmem:[%s359 + $0x78] sm:$0xff] %vm887, %v886
        %s904 = sadd.s32 %s24, %s23
        %s905 = sadd.s32 %s904, %s25
        %s906 = smul.u32 2, %s905
        %p907 = scmp.lt.s32.totalorder %s906, 3
        %s908 = scalar_select %p907, %s906, 3
        %s909 = scalar_lea.vmem %s5, %s908
        %p910 = scmp.lt.s32.totalorder %s23, 0
        %s911 = scalar_select %p910, %s23, 0
        %p912 = scmp.lt.s32.totalorder %s24, 1
        %s913 = scalar_select %p912, %s24, 1
        %s914 = smul.addr %s913, 16
        %s915 = smul.addr %s911, 32
        %s916 = sadd.s32 %s914, %s915
        %s917 = smul.addr %s916, 8
        %s918 = scalar_lea.vmem %s6, %s917
        // Predicated region
        $region83: #{sixdofnet_forward.1} parent=73 // pred_check
          %p919 = pneg %p173
        $region84: #{sixdofnet_forward.1} parent=73 // pred_check_branch
          %921 = sbr.rel (%p919) target = $region86
        $region85: #{sixdofnet_forward.1} parent=73 // pred_region
          %s922 = sadd.s32 %s24, %s23
          %s923 = sadd.s32 %s922, %s25
          %s924 = smul.u32 2, %s923
        $region86: #{sixdofnet_forward.1} parent=73 // pred_fallthru
          _
        // Predicated region
        $region87: #{sixdofnet_forward.1} parent=73 // pred_check
          %p925 = pneg %p201
        $region88: #{sixdofnet_forward.1} parent=73 // pred_check_branch
          %927 = sbr.rel (%p925) target = $region90
        $region89: #{sixdofnet_forward.1} parent=73 // pred_region
          _
        $region90: #{sixdofnet_forward.1} parent=73 // pred_fallthru
          _
      $region74: #{sixdofnet_forward.1} parent=5 // pred_fallthru
        _
      %p928 = scmp.le.s32.totalorder 2, %s13
      // Predicated region
      $region91: #{sixdofnet_forward.1} parent=5 // pred_check
        %p929 = pneg %p928
      $region92: #{sixdofnet_forward.1} parent=5 // pred_check_branch
        %931 = sbr.rel (%p929) target = $region94
      $region93: #{sixdofnet_forward.1} parent=5 // pred_region
        %s932 = ssub.s32 %s13, 2
        // Predicated region
        $region95: #{sixdofnet_forward.1} parent=93 // pred_check
          %p933 = pneg %p179
        $region96: #{sixdofnet_forward.1} parent=93 // pred_check_branch
          %935 = sbr.rel (%p933) target = $region98
        $region97: #{sixdofnet_forward.1} parent=93 // pred_region
          %s936 = sadd.s32 %s27, %s26
          %s937 = sadd.s32 %s936, %s28
          %s938 = smul.u32 2, %s937
          %p939 = scmp.lt.s32.totalorder %s938, 3
          %s940 = scalar_select %p939, %s938, 3
          %s941 = scalar_lea.vmem %s5, %s940
        $region98: #{sixdofnet_forward.1} parent=93 // pred_fallthru
          _
        // Predicated region
        $region99: #{sixdofnet_forward.1} parent=93 // pred_check
          %p942 = pneg %p207
        $region100: #{sixdofnet_forward.1} parent=93 // pred_check_branch
          %944 = sbr.rel (%p942) target = $region102
        $region101: #{sixdofnet_forward.1} parent=93 // pred_region
          %p945 = scmp.lt.s32.totalorder %s26, 0
          %s946 = scalar_select %p945, %s26, 0
          %p947 = scmp.lt.s32.totalorder %s27, 1
          %s948 = scalar_select %p947, %s27, 1
          %s949 = smul.addr %s948, 16
          %s950 = smul.addr %s946, 32
          %s951 = sadd.s32 %s949, %s950
          %s952 = smul.addr %s951, 8
          %s953 = scalar_lea.vmem %s6, %s952
        $region102: #{sixdofnet_forward.1} parent=93 // pred_fallthru
          _
      $region94: #{sixdofnet_forward.1} parent=5 // pred_fallthru
        _
    $region6: #{sixdofnet_forward.1} parent=1 // loop_footer
      %s17 = sadd.s32 1, %s13
    $region7: #{sixdofnet_forward.1} parent=1 // loop_footer_branch
      %12 = sbr.rel target = $region3
    $region8: #{sixdofnet_forward.1} parent=1 // loop_exit
      _

</llo_original>
